<compile_context>
chip_gen: v6e
topology: v6e:2x2x1
jax: 0.10.0
libtpu: 0.0.40
codegen_flags: <defaults>
</compile_context>

<pallas_src>
import jax
import jax.numpy as jnp
from jax import lax
from jax.experimental import pallas as pl
from jax.experimental.pallas import tpu as pltpu

KERNEL_SIZES = (3, 5, 7)
MAXPAD = max(KERNEL_SIZES) // 2      # 3
NTAPS = 2 * MAXPAD + 1               # 7
PRICE_C, VOL_C = 4, 1
C_IN = PRICE_C + VOL_C               # 5 packed input channels
K_COLS = NTAPS * C_IN + 1            # 36 = 35 tap*channel columns + 1 ones column (bias)


# --------------------------------- kernel ---------------------------------
def msfp_kernel(x_ref, w_ref, out_ref):
    """x_ref  : (1, TP, r*K_COLS) wrapper-built im2col tile (ones column per sub-row)
       w_ref  : (r*K_COLS, r*D)   block-diag folded conv+fusion weight (+ bias rows)
       out_ref: (1, TP, r*D)      row-packed output tile."""
    y = jnp.dot(x_ref[0], w_ref[...], preferred_element_type=jnp.float32)
    out_ref[0] = y.astype(out_ref.dtype)


# ------------------------- offline weight folding -------------------------
def _fold_params(params, d_model):
    """Fold the 6 Conv1d branches + fusion Linear into one (K_COLS, D) weight whose last
    row is the fused bias (matched by a ones column appended to the im2col input)."""
    D = d_model
    fw = params["fusion_w"]                       # (D, 6D) torch Linear layout
    fb = params["fusion_b"]                       # (D,)
    hp = lax.Precision.HIGHEST

    w_eff = jnp.zeros((NTAPS, C_IN, D), jnp.float32)
    b_eff = fb.astype(jnp.float32)

    branches = (
        [(w, b, k, 0) for (w, b), k in zip(params["price_convs"], KERNEL_SIZES)] +
        [(w, b, k, PRICE_C) for (w, b), k in zip(params["volume_convs"], KERNEL_SIZES)]
    )
    for i, (w, b, k, c0) in enumerate(branches):       # order matches torch.cat
        p = k // 2
        fw_slice = fw[:, i * D:(i + 1) * D].T.astype(jnp.float32)   # (D, D): feat_i @ fw_slice
        taps = jnp.einsum("dck,de->kce", w.astype(jnp.float32), fw_slice, precision=hp)
        w_eff = w_eff.at[MAXPAD - p:MAXPAD + p + 1, c0:c0 + w.shape[1], :].add(taps)
        b_eff = b_eff + jnp.einsum("d,de->e", b.astype(jnp.float32), fw_slice, precision=hp)

    w_full = jnp.concatenate([w_eff.reshape(NTAPS * C_IN, D), b_eff[None, :]], axis=0)
    return w_full                                      # (K_COLS, D)


# --------------------------------- wrapper ---------------------------------
def multi_scale_feature_processor(price, volume, params, *, tile_t=1024):
    """price: (B, T, 4), volume: (B, T, 1) -> (B, T, d_model)."""
    B, T, _ = price.shape
    D = params["fusion_b"].shape[0]
    out_dtype = price.dtype

    # Row-packing factor: pack r time rows per output row so stores stay lane-dense
    # without padding D and without a post-kernel slice copy.
    if D < 128 and 128 % D == 0 and T % (128 // D) == 0:
        r = 128 // D
    else:
        r = 1

    T_pack = T // r                               # logical output rows (packed)
    tp = max(1, min(tile_t // r, T_pack))         # packed rows per tile
    if tp < T_pack:
        tp = max(8, (tp // 8) * 8)                # multi-tile: multiple of 8 (sublane rule)
    nt = pl.cdiv(T_pack, tp)
    if nt == 1:
        tp = T_pack                               # single tile: block == full dim is legal
    T_in = nt * tp * r                            # time rows the kernel consumes (zero-padded)

    # ---- wrapper-side im2col: 7 shifted 5-channel slices + ones column -> (B, T_in, 36) ----
    x5 = jnp.concatenate([price, volume], axis=-1).astype(jnp.float32)      # (B, T, 5)
    xpad = jnp.pad(x5, ((0, 0), (MAXPAD, T_in + MAXPAD - T), (0, 0)))       # 'same' zero pad
    cols = [xpad[:, s:s + T_in, :] for s in range(NTAPS)]
    ones = jnp.ones((B, T_in, 1), jnp.float32)
    x_cols = jnp.concatenate(cols + [ones], axis=-1)                        # (B, T_in, 36)
    x_in = x_cols.reshape(B, T_in // r, r * K_COLS)          # free contiguous reshape

    # ---- folded weight; block-diagonal replication for row packing ----
    w_full = _fold_params(params, D)                          # (36, D)
    w_big = jnp.kron(jnp.eye(r, dtype=w_full.dtype), w_full) if r > 1 else w_full

    rK, rD = r * K_COLS, r * D

    # ---- explicit VMEM budget: double-buffered in/out blocks + weight + headroom ----
    lane = lambda n: pl.cdiv(n, 128) * 128
    sub = lambda n: pl.cdiv(n, 8) * 8
    vmem_bytes = 2 * (sub(tp) * lane(rK) + sub(tp) * lane(rD) + sub(rK) * lane(rD)) * 4
    vmem_limit = min(max(vmem_bytes + (8 << 20), 32 << 20), 120 << 20)

    # TODO(synk): bf16 cast of x_in / w_big (and bf16 output) for v6e/v7x if downstream allows.
    out = pl.pallas_call(
        msfp_kernel,
        out_shape=jax.ShapeDtypeStruct((B, T_pack, rD), out_dtype),
        grid_spec=pltpu.PrefetchScalarGridSpec(
            num_scalar_prefetch=0,
            grid=(nt, B),                                   # time tiles lead (v7x 2-TC sharding)
            in_specs=[
                pl.BlockSpec((1, tp, rK), lambda j, b: (b, j, 0)),   # per-tile im2col block
                pl.BlockSpec((rK, rD), lambda j, b: (0, 0)),         # constant weight block
            ],
            out_specs=pl.BlockSpec((1, tp, rD), lambda j, b: (b, j, 0)),
        ),
        compiler_params=pltpu.CompilerParams(
            dimension_semantics=("parallel", "parallel"),
            vmem_limit_bytes=vmem_limit),
    )(x_in, w_big)
    return out.reshape(B, T, D)       # free for r>1 (contiguous); identity for r==1


# ---------------- deterministic parameter init (torch layouts) ----------------
def init_params(key, d_model):
    keys = iter(jax.random.split(key, 20))

    def nrm(shape, scale=0.1):
        return scale * jax.random.normal(next(keys), shape, jnp.float32)

    price_convs = [(nrm((d_model, PRICE_C, k)), nrm((d_model,))) for k in KERNEL_SIZES]
    volume_convs = [(nrm((d_model, VOL_C, k)), nrm((d_model,))) for k in KERNEL_SIZES]
    fusion_w = nrm((d_model, 6 * d_model))
    fusion_b = nrm((d_model,))
    return {
        "price_convs": price_convs,
        "volume_convs": volume_convs,
        "fusion_w": fusion_w,
        "fusion_b": fusion_b,
    }


# ---------------- pure-JAX reference (matches PyTorch semantics) ----------------
def ref_forward(price, volume, params):
    def conv1d(x_btC, w, b, k):
        x = jnp.transpose(x_btC, (0, 2, 1))       # NCL, like price_data.transpose(1,2)
        p = k // 2
        y = lax.conv_general_dilated(
            x, w, window_strides=(1,), padding=[(p, p)],
            dimension_numbers=("NCH", "OIH", "NCH"))
        return y + b[None, :, None]               # (B, D, T)

    feats = [conv1d(price, w, b, k) for (w, b), k in zip(params["price_convs"], KERNEL_SIZES)]
    feats += [conv1d(volume, w, b, k) for (w, b), k in zip(params["volume_convs"], KERNEL_SIZES)]
    combined = jnp.concatenate(feats, axis=1)          # (B, 6D, T)
    combined_t = jnp.transpose(combined, (0, 2, 1))    # (B, T, 6D)
    return combined_t @ params["fusion_w"].T + params["fusion_b"]


if __name__ == "__main__":
    master_key = jax.random.PRNGKey(0)

    def run_case(B, T, D, tile_t):
        kp, kv, kw = jax.random.split(jax.random.fold_in(master_key, 1000 * B + T + D), 3)
        price = jax.random.normal(kp, (B, T, 4), jnp.float32)
        volume = jax.random.normal(kv, (B, T, 1), jnp.float32)
        params = init_params(kw, D)

        out = multi_scale_feature_processor(price, volume, params, tile_t=tile_t)
        out = jax.block_until_ready(out)
        ref = ref_forward(price, volume, params)
        assert out.shape == (B, T, D), out.shape
        if not bool(jnp.allclose(out, ref, atol=1e-4, rtol=1e-4)):
            err = float(jnp.max(jnp.abs(out - ref)))
            raise AssertionError(f"Pallas kernel does not match JAX reference (max err {err})")

    # small shapes consistent with the module: (B, T, 4) price and (B, T, 1) volume
    run_case(B=2, T=16, D=32, tile_t=512)   # r=4 row-packing, single packed time tile
    run_case(B=1, T=40, D=64, tile_t=16)    # r=2 row-packing, multi-tile, masked partial tail
    run_case(B=2, T=24, D=128, tile_t=16)   # r=1 lane-dense D, masked partial last time tile
    run_case(B=1, T=20, D=48, tile_t=512)   # r=1, D not a divisor of 128, full-dim blocks
    print("KERNEL_OK")
</pallas_src>

<mosaic_0001>
module attributes {stable_mosaic.version = 11 : i64} {
  func.func @msfp_kernel(%arg0: i32, %arg1: i32, %arg2: memref<1x4x144xf32, #tpu.memory_space<vmem>>, %arg3: memref<144x128xf32, #tpu.memory_space<vmem>>, %arg4: memref<1x4x128xf32, #tpu.memory_space<vmem>>) attributes {dimension_semantics = [#tpu.dimension_semantics<parallel>, #tpu.dimension_semantics<parallel>], iteration_bounds = array<i64: 1, 2>, scalar_prefetch = 0 : i64, scratch_operands = 0 : i64, tpu.core_type = #tpu.core_type<tc>, window_params = [{transform_indices = @transform_0, window_bounds = array<i64: 1, 4, 144>}, {pipeline_mode = #tpu.pipeline_mode<synchronous>, transform_indices = @transform_1, window_bounds = array<i64: 144, 128>}, {transform_indices = @transform_2, window_bounds = array<i64: 1, 4, 128>}]} {
    %c0 = arith.constant 0 : index
    %c0_0 = arith.constant 0 : index
    %c0_1 = arith.constant 0 : index
    %0 = vector.load %arg2[%c0, %c0_0, %c0_1] : memref<1x4x144xf32, #tpu.memory_space<vmem>>, vector<1x4x144xf32>
    %1 = vector.shape_cast %0 : vector<1x4x144xf32> to vector<4x144xf32>
    %c0_2 = arith.constant 0 : index
    %c0_3 = arith.constant 0 : index
    %2 = vector.load %arg3[%c0_2, %c0_3] : memref<144x128xf32, #tpu.memory_space<vmem>>, vector<144x128xf32>
    %cst = arith.constant dense<0.000000e+00> : vector<4x128xf32>
    %3 = tpu.matmul %1, %2, %cst {dimension_numbers = #tpu.dot_dimension_numbers<[1], [0], [0], [1], [0, 0, 1, 1], [], []>} : vector<4x144xf32>, vector<144x128xf32>, vector<4x128xf32> -> vector<4x128xf32>
    %c0_4 = arith.constant 0 : index
    %c0_5 = arith.constant 0 : index
    %c0_6 = arith.constant 0 : index
    %4 = vector.load %arg4[%c0_4, %c0_5, %c0_6] : memref<1x4x128xf32, #tpu.memory_space<vmem>>, vector<1x4x128xf32>
    %5 = vector.shape_cast %4 : vector<1x4x128xf32> to vector<4x128xf32>
    %6 = vector.shape_cast %3 : vector<4x128xf32> to vector<1x4x128xf32>
    tpu.vector_store %arg4[%c0_4, %c0_5, %c0_6], %6 {strides = array<i32>} : memref<1x4x128xf32, #tpu.memory_space<vmem>>, vector<1x4x128xf32>,
    return
  }
  func.func @transform_0(%arg0: i32, %arg1: i32) -> (i32, i32, i32) {
    %c0_i32 = arith.constant 0 : i32
    %c0_i32_0 = arith.constant 0 : i32
    return %arg1, %arg0, %c0_i32 : i32, i32, i32
  }
  func.func @transform_1(%arg0: i32, %arg1: i32) -> (i32, i32) {
    %c0_i32 = arith.constant 0 : i32
    %c0_i32_0 = arith.constant 0 : i32
    %c0_i32_1 = arith.constant 0 : i32
    return %c0_i32, %c0_i32_0 : i32, i32
  }
  func.func @transform_2(%arg0: i32, %arg1: i32) -> (i32, i32, i32) {
    %c0_i32 = arith.constant 0 : i32
    %c0_i32_0 = arith.constant 0 : i32
    return %arg1, %arg0, %c0_i32 : i32, i32, i32
  }
}

</mosaic_0001>

<llo_original>
// kernel: tpu_custom_call.1
$region0: #{tpu_custom_call.1}
  #allocation0 [shape = 'u32[]', space=smem, size = 0x4, offset = 0x4, fixed_abs, tag = 'smem constant byte address 0x4 - core index']
  #allocation1 [shape = 'u32[144,128]{1,0:T(1,128)}', space=vmem, size = 0x12000, scoped, tag = 'internal scratch']
  %s0 = inlined_call_operand.hbm [shape: f32[2,4,144], index: 0, kind: input, shape index: {}]
  %s1 = inlined_call_operand.hbm [shape: f32[144,128], index: 1, kind: input, shape index: {}]
  %s2 = inlined_call_operand.hbm [shape: f32[2,4,128], index: 2, kind: output, shape index: {}]
  %s3 = sld [smem:[#allocation0]]
  $region49: #{tpu_custom_call.1} parent=0
    _
  %s5 = ssub.s32 1, %s3
  %s6 = scalar_select 0, %s5, %s3
  $region1: #{tpu_custom_call.1} parent=0
    #allocation2 [shape = 'u8[8192]{0}', space=vmem, size = 0x2000, scoped, tag = 'input window, operand 0']
    #allocation3 [shape = 's32[2]{0}', space=sflag, size = 0x8, scoped, tag = 'scoped memory for tpu_custom_call.1']
    #allocation4 [shape = 's32[2]{0}', space=sflag, size = 0x8, scoped, tag = 'scoped memory for tpu_custom_call.1']
    #allocation5 [shape = 'u8[73728]{0}', space=vmem, size = 0x12000, scoped, tag = 'input window, operand 1, single buffered']
    #allocation6 [shape = 's32[1]{0}', space=sflag, size = 0x4, scoped, tag = 'scoped memory for tpu_custom_call.1']
    #allocation7 [shape = 'u8[4096]{0}', space=vmem, size = 0x1000, scoped, tag = 'output window, operand 0']
    %7 = vsyncpa [#allocation3], 0
    %s8 = scalar_lea.sflag [#allocation3], 1
    %9 = vsyncpa %s8, 0
    %10 = vsyncpa [#allocation6], 0
    %11 = vsyncpa [#allocation4], 0
    %s12 = scalar_lea.sflag [#allocation4], 1
    %13 = vsyncpa %s12, 0
    loop: start=0, step=1, limit=4
    $region2: #{tpu_custom_call.1} parent=1 // loop_pre_header
      _
    $region3: #{tpu_custom_call.1} parent=1 // loop_header
      %s15 = sphi 0, %s19
      %p16 = scmp.ge.s32.totalorder %s15, 4
      %s22 = sphi 0, %s34
      %s23 = sphi 0, %s30
      %s24 = sphi 0, %s22
      %s25 = sphi 0, %s23
      %s26 = sphi 0, %s24
      %s27 = sphi 0, %s25
      %s39 = sphi 0, %s41
      %s42 = sphi 0, %s39
      %s43 = sphi 0, %s42
      %s59 = sphi 0, %s43
      %s63 = sphi 0, %s63
      %s65 = sphi 0, %s63
      %s66 = sphi 0, %s65
      %s80 = sphi 0, %s66
      %s88 = sphi 0, %s90
      %s91 = sphi 0, %s88
      %s92 = sphi 0, %s91
      %s108 = sphi 0, %s92
    $region4: #{tpu_custom_call.1} parent=1 // loop_header_branch
      %18 = sbr.rel (%p16) target = $region8
    $region5: #{tpu_custom_call.1} parent=1 // loop_body
      %s20 = ssub.s32 %s15, 1
      %s21 = ssub.s32 %s15, 2
      %s28 = sadd.s32 1, %s23
      %p29 = scmp.ge.s32.totalorder %s28, 2
      %s30 = scalar_select %p29, 0, %s28
      %s31 = sadd.s32 1, %s22
      %s32 = scalar_select %p29, %s31, %s22
      %p33 = scmp.ge.s32.totalorder %s32, 1
      %s34 = scalar_select %p33, 0, %s32
      %s35 = ssub.s32 %s23, %s30
      %s36 = ssub.s32 %s22, %s34
      %s37 = sor.u32 %s35, %s36
      %p38 = scmp.eq.s32.totalorder %s37, 0
      %s40 = sadd.s32 %s39, 1
      %s41 = scalar_select %p38, %s39, %s40
      %p44 = pneg %p38
      %p45 = scmp.eq.s32.totalorder %s15, 1
      %p46 = por %p44, %p45
      %p47 = scmp.ne.s32.totalorder %s39, %s42
      %p48 = scmp.eq.s32.totalorder %s15, 0
      %p49 = por %p47, %p48
      %p50 = scmp.ne.s32.totalorder %s39, %s42
      %p51 = scmp.eq.s32.totalorder %s20, 1
      %p52 = por %p50, %p51
      %p53 = scmp.ne.s32.totalorder %s42, %s43
      %p54 = scmp.eq.s32.totalorder %s20, 0
      %p55 = por %p53, %p54
      %p56 = scmp.ne.s32.totalorder %s42, %s43
      %p57 = scmp.eq.s32.totalorder %s21, 1
      %p58 = por %p56, %p57
      %p60 = scmp.ne.s32.totalorder %s43, %s59
      %p61 = scmp.eq.s32.totalorder %s21, 0
      %p62 = por %p60, %p61
      %s64 = sadd.s32 %s63, 1
      %p67 = scmp.eq.s32.totalorder %s15, 1
      %p68 = scmp.ne.s32.totalorder %s63, %s65
      %p69 = scmp.eq.s32.totalorder %s15, 0
      %p70 = por %p68, %p69
      %p71 = scmp.ne.s32.totalorder %s63, %s65
      %p72 = scmp.eq.s32.totalorder %s20, 1
      %p73 = por %p71, %p72
      %p74 = scmp.ne.s32.totalorder %s65, %s66
      %p75 = scmp.eq.s32.totalorder %s20, 0
      %p76 = por %p74, %p75
      %p77 = scmp.ne.s32.totalorder %s65, %s66
      %p78 = scmp.eq.s32.totalorder %s21, 1
      %p79 = por %p77, %p78
      %p81 = scmp.ne.s32.totalorder %s66, %s80
      %p82 = scmp.eq.s32.totalorder %s21, 0
      %p83 = por %p81, %p82
      %s84 = ssub.s32 %s23, %s30
      %s85 = ssub.s32 %s22, %s34
      %s86 = sor.u32 %s84, %s85
      %p87 = scmp.eq.s32.totalorder %s86, 0
      %s89 = sadd.s32 %s88, 1
      %s90 = scalar_select %p87, %s88, %s89
      %p93 = pneg %p87
      %p94 = scmp.eq.s32.totalorder %s15, 1
      %p95 = por %p93, %p94
      %p96 = scmp.ne.s32.totalorder %s88, %s91
      %p97 = scmp.eq.s32.totalorder %s15, 0
      %p98 = por %p96, %p97
      %p99 = scmp.ne.s32.totalorder %s88, %s91
      %p100 = scmp.eq.s32.totalorder %s20, 1
      %p101 = por %p99, %p100
      %p102 = scmp.ne.s32.totalorder %s91, %s92
      %p103 = scmp.eq.s32.totalorder %s20, 0
      %p104 = por %p102, %p103
      %p105 = scmp.ne.s32.totalorder %s91, %s92
      %p106 = scmp.eq.s32.totalorder %s21, 1
      %p107 = por %p105, %p106
      %p109 = scmp.ne.s32.totalorder %s92, %s108
      %p110 = scmp.eq.s32.totalorder %s21, 0
      %p111 = por %p109, %p110
      %p112 = scmp.le.s32.totalorder 1, %s15
      %p113 = scmp.lt.s32.totalorder %s15, 3
      %p114 = pnand %p112, %p113
      %p115 = pneg %p114
      // Predicated region
      $region9: #{tpu_custom_call.1} parent=5 // pred_check
        _
      $region10: #{tpu_custom_call.1} parent=5 // pred_check_branch
        %117 = sbr.rel (%p114) target = $region12
      $region11: #{tpu_custom_call.1} parent=5 // pred_region
        %s118 = ssub.s32 %s15, 1
        // Predicated region
        $region13: #{tpu_custom_call.1} parent=11 // pred_check
          %p119 = pneg %p76
        $region14: #{tpu_custom_call.1} parent=11 // pred_check_branch
          %121 = sbr.rel (%p119) target = $region16
        $region15: #{tpu_custom_call.1} parent=11 // pred_region
          %s123 = ssub.s32 2304, 2304
          %124 = vsyncadd [#allocation6], %s123
          %s125 = sshll.u32 [#allocation5], 4
          %s126 = int_to_ptr.vmem [resolvable:$true] %s125
          %131 = dma.hbm_to_vmem [thread:$0]  %s1, 2304, %s126, [#allocation6], 128, 128, 8
        $region16: #{tpu_custom_call.1} parent=11 // pred_fallthru
          _
      $region12: #{tpu_custom_call.1} parent=5 // pred_fallthru
        _
      %p132 = scmp.lt.s32.totalorder %s15, 2
      // Predicated region
      $region17: #{tpu_custom_call.1} parent=5 // pred_check
        %p133 = pneg %p132
      $region18: #{tpu_custom_call.1} parent=5 // pred_check_branch
        %135 = sbr.rel (%p133) target = $region20
      $region19: #{tpu_custom_call.1} parent=5 // pred_region
        // Predicated region
        $region21: #{tpu_custom_call.1} parent=19 // pred_check
          %p136 = pneg %p49
        $region22: #{tpu_custom_call.1} parent=19 // pred_check_branch
          %138 = sbr.rel (%p136) target = $region24
        $region23: #{tpu_custom_call.1} parent=19 // pred_region
          %s139 = sand.u32 %s39, 1
          %s140 = scalar_lea.sflag [#allocation3], %s139
          %s141 = sand.u32 %s39, 1
          %s142 = smul.addr %s141, 8
          %s143 = scalar_lea.vmem [#allocation2], %s142
          %s145 = ssub.s32 128, 128
          %146 = vsyncadd %s140, %s145
          %s147 = smul.addr %s22, 2
          %s148 = smul.addr %s23, 2
          %s149 = sadd.s32 %s147, %s148
          %s150 = smul.addr %s149, 64
          %s151 = scalar_lea.hbm %s0, %s150
          %s153 = sshll.u32 %s143, 4
          %s154 = int_to_ptr.vmem [resolvable:$true] %s153
          %156 = dma.hbm_to_vmem [thread:$0]  %s151, 128, %s154, %s140
        $region24: #{tpu_custom_call.1} parent=19 // pred_fallthru
          _
      $region20: #{tpu_custom_call.1} parent=5 // pred_fallthru
        _
      %p157 = scmp.le.s32.totalorder 1, %s15
      %p158 = scmp.lt.s32.totalorder %s15, 3
      %p159 = pnand %p157, %p158
      %p160 = pneg %p159
      // Predicated region
      $region25: #{tpu_custom_call.1} parent=5 // pred_check
        _
      $region26: #{tpu_custom_call.1} parent=5 // pred_check_branch
        %162 = sbr.rel (%p159) target = $region28
      $region27: #{tpu_custom_call.1} parent=5 // pred_region
        %s163 = ssub.s32 %s15, 1
        %s164 = sand.u32 %s42, 1
        %s165 = scalar_lea.sflag [#allocation3], %s164
        %s166 = sand.u32 %s42, 1
        %s167 = smul.addr %s166, 8
        %s168 = scalar_lea.vmem [#allocation2], %s167
        // Predicated region
        $region29: #{tpu_custom_call.1} parent=27 // pred_check
          %p169 = pneg %p55
        $region30: #{tpu_custom_call.1} parent=27 // pred_check_branch
          %171 = sbr.rel (%p169) target = $region32
        $region31: #{tpu_custom_call.1} parent=27 // pred_region
          %172 = dma.done %s165, 128
        $region32: #{tpu_custom_call.1} parent=27 // pred_fallthru
          _
        // Predicated region
        $region33: #{tpu_custom_call.1} parent=27 // pred_check
          %p173 = pneg %p76
        $region34: #{tpu_custom_call.1} parent=27 // pred_check_branch
          %175 = sbr.rel (%p173) target = $region36
        $region35: #{tpu_custom_call.1} parent=27 // pred_region
          %176 = dma.done [#allocation6], 2304
        $region36: #{tpu_custom_call.1} parent=27 // pred_fallthru
          _
        %s177 = sand.u32 %s42, 1
        %s178 = scalar_lea.sflag [#allocation3], %s177
        %s179 = sand.u32 %s42, 1
        %s180 = smul.addr %s179, 8
        %s181 = scalar_lea.vmem [#allocation2], %s180
        %p182 = pneg %p55
        %p183 = pneg %p52
        %p184 = pneg %p76
        %p185 = pneg %p73
        %p186 = pneg %p104
        %p187 = pneg %p101
        %s188 = sand.u32 %s91, 1
        %s189 = scalar_lea.sflag [#allocation4], %s188
        %s190 = sand.u32 %s91, 1
        %s191 = smul.addr %s190, 4
        %s192 = scalar_lea.vmem [#allocation7], %s191
        %v193 = vld [vmem:[%s168] sm:$0xff]
        %v194 = vld [vmem:[#allocation5] sm:$0xff]
        %v195 = vld [vmem:[#allocation5 + $0x8] sm:$0xff]
        %v196 = vld [vmem:[#allocation5 + $0x10] sm:$0xff]
        %v197 = vld [vmem:[#allocation5 + $0x18] sm:$0xff]
        %v198 = vld [vmem:[#allocation5 + $0x20] sm:$0xff]
        %v199 = vld [vmem:[#allocation5 + $0x28] sm:$0xff]
        %v200 = vld [vmem:[#allocation5 + $0x30] sm:$0xff]
        %v201 = vld [vmem:[#allocation5 + $0x38] sm:$0xff]
        %v202 = vld [vmem:[#allocation5 + $0x40] sm:$0xff]
        %v203 = vld [vmem:[#allocation5 + $0x48] sm:$0xff]
        %v204 = vld [vmem:[#allocation5 + $0x50] sm:$0xff]
        %v205 = vld [vmem:[#allocation5 + $0x58] sm:$0xff]
        %v206 = vld [vmem:[#allocation5 + $0x60] sm:$0xff]
        %v207 = vld [vmem:[#allocation5 + $0x68] sm:$0xff]
        %v208 = vld [vmem:[#allocation5 + $0x70] sm:$0xff]
        %v209 = vld [vmem:[#allocation5 + $0x78] sm:$0xff]
        %v210 = vld [vmem:[#allocation5 + $0x80] sm:$0xff]
        %v211 = vld [vmem:[#allocation5 + $0x88] sm:$0xff]
        %v213 = vcombine.high %v193, %v193
        %vm214 = vcmask 130048
        %v215 = vsel %vm214, %v213, 0
        %217 = vmatprep.subr.mxu0 0.0
        %218 = vmatpush1.msra.mxu0 %v209
        %219 = vmatprep.subr.mxu0 0.0
        %220 = vmatpush1.msra.mxu0 %v208
        %221 = vmatprep.subr.mxu0 0.0
        %222 = vmatpush1.msra.mxu0 %v207
        %223 = vmatprep.subr.mxu0 0.0
        %224 = vmatpush1.msra.mxu0 %v206
        %225 = vmatprep.subr.mxu0 0.0
        %226 = vmatpush1.msra.mxu0 %v205
        %227 = vmatprep.subr.mxu0 0.0
        %228 = vmatpush1.msra.mxu0 %v204
        %229 = vmatprep.subr.mxu0 0.0
        %230 = vmatpush1.msra.mxu0 %v203
        %231 = vmatprep.subr.mxu0 0.0
        %232 = vmatpush1.msra.mxu0 %v202
        %233 = vmatprep.subr.mxu0 0.0
        %234 = vmatpush1.msra.mxu0 %v201
        %235 = vmatprep.subr.mxu0 0.0
        %236 = vmatpush1.msra.mxu0 %v200
        %237 = vmatprep.subr.mxu0 0.0
        %238 = vmatpush1.msra.mxu0 %v199
        %239 = vmatprep.subr.mxu0 0.0
        %240 = vmatpush1.msra.mxu0 %v198
        %241 = vmatprep.subr.mxu0 0.0
        %242 = vmatpush1.msra.mxu0 %v197
        %243 = vmatprep.subr.mxu0 0.0
        %244 = vmatpush1.msra.mxu0 %v196
        %245 = vmatprep.subr.mxu0 0.0
        %246 = vmatpush1.msra.mxu0 %v195
        %247 = vmatprep.subr.mxu0 0.0
        %248 = vmatpush1.msra.mxu0 %v194
        %249 = vmatprep.subr.mxu0 0.0
        %250 = vmatpush2.msra.mxu0 0.0
        %251 = vmatprep.subr.mxu0 0.0
        %252 = vmatpush2.msra.mxu0 0.0
        %253 = vmatprep.subr.mxu0 0.0
        %254 = vmatpush2.msra.mxu0 0.0
        %255 = vmatprep.subr.mxu0 0.0
        %256 = vmatpush2.msra.mxu0 0.0
        %257 = vmatprep.subr.mxu0 0.0
        %258 = vmatpush2.msra.mxu0 0.0
        %259 = vmatprep.subr.mxu0 0.0
        %260 = vmatpush2.msra.mxu0 0.0
        %261 = vmatprep.subr.mxu0 0.0
        %262 = vmatpush2.msra.mxu0 0.0
        %263 = vmatprep.subr.mxu0 0.0
        %264 = vmatpush2.msra.mxu0 0.0
        %265 = vmatprep.subr.mxu0 0.0
        %266 = vmatpush2.msra.mxu0 0.0
        %267 = vmatprep.subr.mxu0 0.0
        %268 = vmatpush2.msra.mxu0 0.0
        %269 = vmatprep.subr.mxu0 0.0
        %270 = vmatpush2.msra.mxu0 0.0
        %271 = vmatprep.subr.mxu0 0.0
        %272 = vmatpush2.msra.mxu0 0.0
        %273 = vmatprep.subr.mxu0 0.0
        %274 = vmatpush2.msra.mxu0 0.0
        %275 = vmatprep.subr.mxu0 0.0
        %276 = vmatpush2.msra.mxu0 0.0
        %277 = vmatprep.subr.mxu0 0.0
        %278 = vmatpush2.msra.mxu0 %v211
        %279 = vmatprep.subr.mxu0 0.0
        %280 = vmatpush2.msra.mxu0 %v210
        %281 = vmatprep.mubr.f32.mxu0 %v215
        %282 = vmatmul.mubr.f32.gmra.mxu0 %v193
        %v283 = vpop.f32.mrf.mxu0
        %v284 = vadd.f32 0.0, %v283
        %v285 = vpop.f32.mrf.mxu0
        %286 = vdwg.mxu0
        %287 = vst [vmem:[%s192] sm:$0xf] %v284
        %s288 = sand.u32 %s91, 1
        %s289 = scalar_lea.sflag [#allocation4], %s288
        %s290 = sand.u32 %s91, 1
        %s291 = smul.addr %s290, 4
        %s292 = scalar_lea.vmem [#allocation7], %s291
        // Predicated region
        $region37: #{tpu_custom_call.1} parent=27 // pred_check
          %p293 = pneg %p101
        $region38: #{tpu_custom_call.1} parent=27 // pred_check_branch
          %295 = sbr.rel (%p293) target = $region40
        $region39: #{tpu_custom_call.1} parent=27 // pred_region
          %s297 = ssub.s32 64, 64
          %298 = vsyncadd %s289, %s297
          %s299 = sadd.s32 %s24, %s25
          %s300 = smul.addr %s299, 64
          %s301 = scalar_lea.hbm %s2, %s300
          %s303 = sshll.u32 %s292, 4
          %s304 = int_to_ptr.vmem [resolvable:$true] %s303
          %306 = dma.vmem_to_hbm [thread:$0]  %s304, 64, %s301, %s289
        $region40: #{tpu_custom_call.1} parent=27 // pred_fallthru
          _
      $region28: #{tpu_custom_call.1} parent=5 // pred_fallthru
        _
      %p307 = scmp.le.s32.totalorder 2, %s15
      // Predicated region
      $region41: #{tpu_custom_call.1} parent=5 // pred_check
        %p308 = pneg %p307
      $region42: #{tpu_custom_call.1} parent=5 // pred_check_branch
        %310 = sbr.rel (%p308) target = $region44
      $region43: #{tpu_custom_call.1} parent=5 // pred_region
        %s311 = ssub.s32 %s15, 2
        // Predicated region
        $region45: #{tpu_custom_call.1} parent=43 // pred_check
          %p312 = pneg %p107
        $region46: #{tpu_custom_call.1} parent=43 // pred_check_branch
          %314 = sbr.rel (%p312) target = $region48
        $region47: #{tpu_custom_call.1} parent=43 // pred_region
          %s315 = sand.u32 %s92, 1
          %s316 = scalar_lea.sflag [#allocation4], %s315
          %s317 = sand.u32 %s92, 1
          %s318 = smul.addr %s317, 4
          %s319 = scalar_lea.vmem [#allocation7], %s318
          %320 = dma.done %s316, 64
        $region48: #{tpu_custom_call.1} parent=43 // pred_fallthru
          _
      $region44: #{tpu_custom_call.1} parent=5 // pred_fallthru
        _
    $region6: #{tpu_custom_call.1} parent=1 // loop_footer
      %s19 = sadd.s32 1, %s15
    $region7: #{tpu_custom_call.1} parent=1 // loop_footer_branch
      %14 = sbr.rel target = $region3
    $region8: #{tpu_custom_call.1} parent=1 // loop_exit
      _
    %321 = vsyncpa [#allocation3], 1
    %s322 = scalar_lea.sflag [#allocation3], 1
    %323 = vsyncpa %s322, 1
    %324 = vsyncpa [#allocation6], 1
    %325 = vsyncpa [#allocation4], 1
    %s326 = scalar_lea.sflag [#allocation4], 1
    %327 = vsyncpa %s326, 1

</llo_original>
